<compile_context>
chip_gen: v7x
topology: tpu7x:2x2x1
jax: 0.10.0
libtpu: 0.0.40
codegen_flags: <defaults>
</compile_context>

<pallas_src>
import jax
import jax.numpy as jnp
from jax.experimental import pallas as pl
from jax.experimental.pallas import tpu as pltpu

_LANES = 128
_SUBLANES = 8


def _pad_rows(n_elems: int) -> int:
    """Rows of a lane-dense (rows, 128) slab holding n_elems, rows % 8 == 0."""
    rows = -(-max(int(n_elems), 1) // _LANES)
    return -(-rows // _SUBLANES) * _SUBLANES


# ---------------------------------------------------------------------------
# Fused kernel:
#   y = x * w + b            (netG = nn.Linear(1, 1), scalar weight/bias, VPU)
#   r = random +/-1 signs    (get_rademacher, counter-based hash PRNG, VPU)
# Scalars (seed, w, b) live in SMEM; slabs live in VMEM.
# ---------------------------------------------------------------------------
def _generator_kernel(seed_ref, w_ref, b_ref, x_ref, y_ref, r_ref):
    # --- (1) Linear(1,1): elementwise multiply-add on a lane-dense slab ------
    w = w_ref[0]
    b = b_ref[0]
    y_ref[...] = x_ref[...] * w + b

    # --- (2) Rademacher signs via a stateless integer hash -------------------
    rows, cols = r_ref.shape
    row_i = jax.lax.broadcasted_iota(jnp.int32, (rows, cols), 0)
    col_i = jax.lax.broadcasted_iota(jnp.int32, (rows, cols), 1)
    ctr = (row_i * cols + col_i).astype(jnp.uint32)          # absolute element index
    s = seed_ref[0].astype(jnp.uint32)
    h = ctr + s * jnp.uint32(0x9E3779B9)
    h = (h ^ (h >> 16)) * jnp.uint32(0x7FEB352D)
    h = (h ^ (h >> 15)) * jnp.uint32(0x846CA68B)
    h = h ^ (h >> 16)
    bit = (h >> 31).astype(jnp.int32)                        # Bernoulli(0.5), top bit
    r_ref[...] = jnp.where(bit == 1, 1.0, -1.0).astype(jnp.float32)


def generator_kernels(x, w_scalar, b_scalar, rad_shape, seed_arr):
    """Fused netG(Linear(1,1)) + get_rademacher.

    x:        (B, 1) float32
    w_scalar: (1,)   float32  (Linear(1,1).weight[0,0])
    b_scalar: (1,)   float32  (Linear(1,1).bias[0])
    rad_shape: tuple of ints
    seed_arr: (1,)   int32 device array

    Returns (y, r): y = x*w+b of shape x.shape, r = +/-1 array of rad_shape.
    """
    n_x = int(x.size)
    n_r = 1
    for d in rad_shape:
        n_r *= int(d)

    rows_x = _pad_rows(n_x)
    rows_r = _pad_rows(n_r)

    # Lane-dense input slab (pad with zeros; padded outputs are sliced away).
    x_slab = (
        jnp.zeros((rows_x * _LANES,), jnp.float32)
        .at[:n_x]
        .set(x.reshape(-1).astype(jnp.float32))
        .reshape(rows_x, _LANES)
    )

    y_slab, r_slab = pl.pallas_call(
        _generator_kernel,
        out_shape=(
            jax.ShapeDtypeStruct((rows_x, _LANES), jnp.float32),
            jax.ShapeDtypeStruct((rows_r, _LANES), jnp.float32),
        ),
        in_specs=[
            pl.BlockSpec(memory_space=pltpu.MemorySpace.SMEM),  # seed
            pl.BlockSpec(memory_space=pltpu.MemorySpace.SMEM),  # weight scalar
            pl.BlockSpec(memory_space=pltpu.MemorySpace.SMEM),  # bias scalar
            pl.BlockSpec(memory_space=pltpu.MemorySpace.VMEM),  # x slab
        ],
        out_specs=(
            pl.BlockSpec(memory_space=pltpu.MemorySpace.VMEM),
            pl.BlockSpec(memory_space=pltpu.MemorySpace.VMEM),
        ),
    )(seed_arr, w_scalar, b_scalar, x_slab)

    y = y_slab.reshape(-1)[:n_x].reshape(x.shape)
    r = r_slab.reshape(-1)[:n_r].reshape(rad_shape)
    return y, r


# ---------------------------------------------------------------------------
# Generator wrapper (JAX/Pallas analogue of the PyTorch base class)
# ---------------------------------------------------------------------------
class GeneratorPallas:
    def __init__(self, gen_conf: dict, key):
        self.noise_size = gen_conf["noise_size"]
        self.bm_dim = gen_conf["bm_dim"]
        self.levy_dim = int(self.bm_dim * (self.bm_dim - 1) // 2)
        self.do_bridge_flipping = gen_conf.get("do_bridge_flipping", True)

        # nn.Linear(1, 1) init: U(-1/sqrt(in_features), 1/sqrt(in_features)) = U(-1, 1)
        kw, kb = jax.random.split(key)
        self.netG_w = jax.random.uniform(kw, (1,), jnp.float32, -1.0, 1.0)
        self.netG_b = jax.random.uniform(kb, (1,), jnp.float32, -1.0, 1.0)

        # TODO(synk): generate_levy_h_triu_indices / forward / generate_bb /
        # netG_from_layer_list are undefined or raise NotImplementedError in the
        # reference base class, and the dict-save/load paths are file I/O;
        # nothing further to translate.

    def netG_and_rademacher(self, x, rad_shape, seed_arr):
        """Single fused pallas_call producing both netG(x) and Rademacher signs."""
        return generator_kernels(x, self.netG_w, self.netG_b, rad_shape, seed_arr)

    def netG_apply(self, x, seed_arr=None):
        if seed_arr is None:
            seed_arr = jnp.zeros((1,), jnp.int32)
        y, _ = generator_kernels(x, self.netG_w, self.netG_b, (1,), seed_arr)
        return y

    def get_rademacher(self, shape, seed_arr):
        dummy_x = jnp.zeros((1, 1), jnp.float32)
        _, r = generator_kernels(dummy_x, self.netG_w, self.netG_b, shape, seed_arr)
        return r


if __name__ == "__main__":
    key = jax.random.PRNGKey(0)
    k_param, k_in = jax.random.split(key)

    gen_conf = {"noise_size": 8, "bm_dim": 4, "do_bridge_flipping": True}
    gen = GeneratorPallas(gen_conf, k_param)

    batch = 8
    # Input matching the placeholder netG = nn.Linear(1, 1): shape (batch, 1)
    x = jax.random.normal(k_in, (batch, 1), dtype=jnp.float32)
    # Seed as a device int32 array, created once (not per call).
    seed_arr = jnp.array([0], dtype=jnp.int32)

    y, r = gen.netG_and_rademacher(x, (batch, gen.levy_dim), seed_arr)
    jax.block_until_ready((y, r))

    # Sanity checks
    y_ref = x * gen.netG_w[0] + gen.netG_b[0]
    assert jnp.allclose(y, y_ref, atol=1e-6), "linear mismatch"
    assert bool(jnp.all(jnp.abs(r) == 1.0)), "rademacher values must be +/-1"
    assert y.shape == (batch, 1) and r.shape == (batch, gen.levy_dim)

    print("KERNEL_OK")
</pallas_src>

<mosaic_0001>
module attributes {stable_mosaic.version = 11 : i64} {
  func.func @_generator_kernel(%arg0: memref<1xi32, #tpu.memory_space<smem>>, %arg1: memref<1xf32, #tpu.memory_space<smem>>, %arg2: memref<1xf32, #tpu.memory_space<smem>>, %arg3: memref<8x128xf32, #tpu.memory_space<vmem>>, %arg4: memref<8x128xf32, #tpu.memory_space<vmem>>, %arg5: memref<8x128xf32, #tpu.memory_space<vmem>>) attributes {dimension_semantics = [], scalar_prefetch = 0 : i64, scratch_operands = 0 : i64, tpu.core_type = #tpu.core_type<tc>} {
    %c0 = arith.constant 0 : index
    %0 = memref.load %arg1[%c0] : memref<1xf32, #tpu.memory_space<smem>>
    %c0_0 = arith.constant 0 : index
    %1 = memref.load %arg2[%c0_0] : memref<1xf32, #tpu.memory_space<smem>>
    %c0_1 = arith.constant 0 : index
    %c0_2 = arith.constant 0 : index
    %2 = vector.load %arg3[%c0_1, %c0_2] : memref<8x128xf32, #tpu.memory_space<vmem>>, vector<8x128xf32>
    %3 = vector.broadcast %0 : f32 to vector<8x128xf32>
    %4 = arith.mulf %2, %3 : vector<8x128xf32>
    %5 = vector.broadcast %1 : f32 to vector<8x128xf32>
    %6 = arith.addf %4, %5 : vector<8x128xf32>
    %c0_3 = arith.constant 0 : index
    %c0_4 = arith.constant 0 : index
    %7 = vector.load %arg4[%c0_3, %c0_4] : memref<8x128xf32, #tpu.memory_space<vmem>>, vector<8x128xf32>
    tpu.vector_store %arg4[%c0_3, %c0_4], %6 {strides = array<i32>} : memref<8x128xf32, #tpu.memory_space<vmem>>, vector<8x128xf32>,
    %8 = tpu.iota {dimensions = array<i32: 0>} : vector<8x128xi32>
    %9 = tpu.iota {dimensions = array<i32: 1>} : vector<8x128xi32>
    %c128_i32 = arith.constant 128 : i32
    %10 = vector.broadcast %c128_i32 : i32 to vector<8x128xi32>
    %11 = arith.muli %8, %10 : vector<8x128xi32>
    %12 = arith.addi %11, %9 : vector<8x128xi32>
    %c0_5 = arith.constant 0 : index
    %13 = memref.load %arg0[%c0_5] : memref<1xi32, #tpu.memory_space<smem>>
    %c-1640531527_i32 = arith.constant -1640531527 : i32
    %14 = arith.muli %13, %c-1640531527_i32 : i32
    %15 = vector.broadcast %14 : i32 to vector<8x128xi32>
    %16 = arith.addi %12, %15 : vector<8x128xi32>
    %c16_i32 = arith.constant 16 : i32
    %17 = vector.broadcast %c16_i32 : i32 to vector<8x128xi32>
    %18 = arith.shrui %16, %17 : vector<8x128xi32>
    %19 = arith.xori %16, %18 : vector<8x128xi32>
    %c2146121005_i32 = arith.constant 2146121005 : i32
    %20 = vector.broadcast %c2146121005_i32 : i32 to vector<8x128xi32>
    %21 = arith.muli %19, %20 : vector<8x128xi32>
    %c15_i32 = arith.constant 15 : i32
    %22 = vector.broadcast %c15_i32 : i32 to vector<8x128xi32>
    %23 = arith.shrui %21, %22 : vector<8x128xi32>
    %24 = arith.xori %21, %23 : vector<8x128xi32>
    %c-2073254261_i32 = arith.constant -2073254261 : i32
    %25 = vector.broadcast %c-2073254261_i32 : i32 to vector<8x128xi32>
    %26 = arith.muli %24, %25 : vector<8x128xi32>
    %c16_i32_6 = arith.constant 16 : i32
    %27 = vector.broadcast %c16_i32_6 : i32 to vector<8x128xi32>
    %28 = arith.shrui %26, %27 : vector<8x128xi32>
    %29 = arith.xori %26, %28 : vector<8x128xi32>
    %c31_i32 = arith.constant 31 : i32
    %30 = vector.broadcast %c31_i32 : i32 to vector<8x128xi32>
    %31 = arith.shrui %29, %30 : vector<8x128xi32>
    %c1_i32 = arith.constant 1 : i32
    %32 = vector.broadcast %c1_i32 : i32 to vector<8x128xi32>
    %33 = arith.cmpi eq, %31, %32 : vector<8x128xi32>
    %cst = arith.constant 1.000000e+00 : f32
    %cst_7 = arith.constant -1.000000e+00 : f32
    %34 = vector.broadcast %cst : f32 to vector<8x128xf32>
    %35 = vector.broadcast %cst_7 : f32 to vector<8x128xf32>
    %36 = arith.select %33, %34, %35 : vector<8x128xi1>, vector<8x128xf32>
    %c0_8 = arith.constant 0 : index
    %c0_9 = arith.constant 0 : index
    %37 = vector.load %arg5[%c0_8, %c0_9] : memref<8x128xf32, #tpu.memory_space<vmem>>, vector<8x128xf32>
    tpu.vector_store %arg5[%c0_8, %c0_9], %36 {strides = array<i32>} : memref<8x128xf32, #tpu.memory_space<vmem>>, vector<8x128xf32>,
    return
  }
}

</mosaic_0001>

<llo_original>
// kernel: tpu_custom_call.1
$region0: #{tpu_custom_call.1}
  #allocation0 [shape = 'u32[]', space=smem, size = 0x4, offset = 0x4, fixed_abs, tag = 'smem constant byte address 0x4 - core index']
  #allocation1 [shape = 'u32[144,128]{1,0:T(1,128)}', space=vmem, size = 0x12000, scoped, tag = 'internal scratch']
  #allocation2 [shape = 's32[1]{0:T(128)S(6)}', space=smem, size = 0x200, scoped, tag = 'scoped memory for tpu_custom_call.1']
  #allocation3 [shape = 'f32[1]{0:T(128)S(6)}', space=smem, size = 0x200, scoped, tag = 'scoped memory for tpu_custom_call.1']
  #allocation4 [shape = 'f32[1]{0:T(128)S(6)}', space=smem, size = 0x200, scoped, tag = 'scoped memory for tpu_custom_call.1']
  %s0 = inlined_call_operand.<no memory space> [shape: s32[1], index: 0, kind: input, shape index: {}]
  %s1 = inlined_call_operand.<no memory space> [shape: f32[1], index: 1, kind: input, shape index: {}]
  %s2 = inlined_call_operand.<no memory space> [shape: f32[1], index: 2, kind: input, shape index: {}]
  %s3 = inlined_call_operand.vmem [shape: f32[8,128], index: 3, kind: input, shape index: {}]
  %s4 = inlined_call_operand.hbm [shape: f32[8,128], index: 4, kind: output, shape index: {0}]
  %s5 = inlined_call_operand.hbm [shape: f32[8,128], index: 5, kind: output, shape index: {1}]
  %6 = xla_tuple %s4, %s5
  %s7 = sld [smem:[#allocation0]]
  $region34: #{tpu_custom_call.1} parent=0
    _
  %s9 = ssub.s32 1, %s7
  %s10 = scalar_select 0, %s9, %s7
  %11 = sst [smem:[#allocation2]] %s0
  %12 = sst [smem:[#allocation3]] %s1
  %13 = sst [smem:[#allocation4]] %s2
  $region1: #{tpu_custom_call.1} parent=0
    #allocation5 [shape = 'u8[4096]{0}', space=vmem, size = 0x1000, scoped, tag = 'output window, operand 0, single buffered']
    #allocation6 [shape = 's32[1]{0}', space=sflag, size = 0x4, scoped, tag = 'scoped memory for tpu_custom_call.1']
    #allocation7 [shape = 'u8[4096]{0}', space=vmem, size = 0x1000, scoped, tag = 'output window, operand 1, single buffered']
    #allocation8 [shape = 's32[1]{0}', space=sflag, size = 0x4, scoped, tag = 'scoped memory for tpu_custom_call.1']
    %14 = vsyncpa [#allocation6], 0
    %15 = vsyncpa [#allocation8], 0
    // Predicated region
    $region2: #{tpu_custom_call.1} parent=1 // pred_check
      _
    $region3: #{tpu_custom_call.1} parent=1 // pred_check_branch
      %17 = sbr.rel (0) target = $region5
    $region4: #{tpu_custom_call.1} parent=1 // pred_region
      _
    $region5: #{tpu_custom_call.1} parent=1 // pred_fallthru
      _
    // Predicated region
    $region6: #{tpu_custom_call.1} parent=1 // pred_check
      _
    $region7: #{tpu_custom_call.1} parent=1 // pred_check_branch
      %19 = sbr.rel (0) target = $region9
    $region8: #{tpu_custom_call.1} parent=1 // pred_region
      _
    $region9: #{tpu_custom_call.1} parent=1 // pred_fallthru
      _
    // Predicated region
    $region10: #{tpu_custom_call.1} parent=1 // pred_check
      _
    $region11: #{tpu_custom_call.1} parent=1 // pred_check_branch
      %21 = sbr.rel (0) target = $region13
    $region12: #{tpu_custom_call.1} parent=1 // pred_region
      _
    $region13: #{tpu_custom_call.1} parent=1 // pred_fallthru
      _
    // Predicated region
    $region14: #{tpu_custom_call.1} parent=1 // pred_check
      _
    $region15: #{tpu_custom_call.1} parent=1 // pred_check_branch
      %23 = sbr.rel (0) target = $region17
    $region16: #{tpu_custom_call.1} parent=1 // pred_region
      _
    $region17: #{tpu_custom_call.1} parent=1 // pred_fallthru
      _
    %s24 = sld [smem:[#allocation3]]
    %s25 = sld [smem:[#allocation4]]
    %v26 = vld [vmem:[%s3] sm:$0xff]
    %v27 = vstv %s24
    %v28 = vmul.f32 %v26, %v27
    %v29 = vstv %s25
    %v30 = vadd.f32 %v28, %v29
    %31 = vst [vmem:[#allocation5] sm:$0xff] %v30
    %v32 = vlaneseq
    %v33 = vshrl.u32 %v32, 7
    %v34 = vlaneseq
    %v35 = vand.u32 %v34, 127
    %v36 = vmul.u32 %v33, 128
    %v37 = vadd.s32 %v36, %v35
    %s38 = sld [smem:[#allocation2]]
    %s39 = smul.u32 %s38, 2654435769
    %v40 = vstv %s39
    %v41 = vadd.s32 %v37, %v40
    %v42 = vshrl.u32 %v41, 16
    %v43 = vxor.u32 %v41, %v42
    %v44 = vmul.u32 %v43, 2146121005
    %v45 = vshrl.u32 %v44, 15
    %v46 = vxor.u32 %v44, %v45
    %v47 = vmul.u32 %v46, 2221713035
    %v48 = vshrl.u32 %v47, 16
    %v49 = vxor.u32 %v47, %v48
    %v50 = vshrl.u32 %v49, 31
    %vm51 = vcmp.eq.s32.totalorder %v50, 1
    %v52 = vsel %vm51, 1.0, -1.0
    %53 = vst [vmem:[#allocation7] sm:$0xff] %v52
    // Predicated region
    $region18: #{tpu_custom_call.1} parent=1 // pred_check
      _
    $region19: #{tpu_custom_call.1} parent=1 // pred_check_branch
      %55 = sbr.rel (0) target = $region21
    $region20: #{tpu_custom_call.1} parent=1 // pred_region
      %s57 = ssub.s32 128, 128
      %58 = vsyncadd [#allocation6], %s57
      %s60 = sshll.u32 [#allocation5], 4
      %s61 = int_to_ptr.vmem [resolvable:$true] %s60
      %63 = dma.vmem_to_hbm [thread:$0]  %s61, 128, %s4, [#allocation6]
    $region21: #{tpu_custom_call.1} parent=1 // pred_fallthru
      _
    // Predicated region
    $region22: #{tpu_custom_call.1} parent=1 // pred_check
      _
    $region23: #{tpu_custom_call.1} parent=1 // pred_check_branch
      %65 = sbr.rel (0) target = $region25
    $region24: #{tpu_custom_call.1} parent=1 // pred_region
      %s67 = ssub.s32 128, 128
      %68 = vsyncadd [#allocation8], %s67
      %s70 = sshll.u32 [#allocation7], 4
      %s71 = int_to_ptr.vmem [resolvable:$true] %s70
      %73 = dma.vmem_to_hbm [thread:$0]  %s71, 128, %s5, [#allocation8]
    $region25: #{tpu_custom_call.1} parent=1 // pred_fallthru
      _
    // Predicated region
    $region26: #{tpu_custom_call.1} parent=1 // pred_check
      _
    $region27: #{tpu_custom_call.1} parent=1 // pred_check_branch
      %75 = sbr.rel (0) target = $region29
    $region28: #{tpu_custom_call.1} parent=1 // pred_region
      %76 = dma.done [#allocation6], 128
    $region29: #{tpu_custom_call.1} parent=1 // pred_fallthru
      _
    // Predicated region
    $region30: #{tpu_custom_call.1} parent=1 // pred_check
      _
    $region31: #{tpu_custom_call.1} parent=1 // pred_check_branch
      %78 = sbr.rel (0) target = $region33
    $region32: #{tpu_custom_call.1} parent=1 // pred_region
      %79 = dma.done [#allocation8], 128
    $region33: #{tpu_custom_call.1} parent=1 // pred_fallthru
      _
    %80 = vsyncpa [#allocation6], 1
    %81 = vsyncpa [#allocation8], 1

</llo_original>
